<compile_context>
chip_gen: v5e
topology: v5e:2x2
jax: 0.10.0
libtpu: 0.0.40
codegen_flags: <defaults>
</compile_context>

<pallas_src>
import functools

import jax
import jax.numpy as jnp
from jax.experimental import pallas as pl
from jax.experimental.pallas import tpu as pltpu

LANES = 128          # vreg lane width
SUBLANES = 8         # vreg sublane height (f32)
NUM_SLICES = 2       # megacore split on v7x; harmless elsewhere
MAX_BLOCK_ROWS = 2048  # 2048 * 128 * 4B = 1 MiB per f32 input tile
                       # => 3 inputs x 2 buffers = 6 MiB, fits every chip's
                       # default scoped VMEM (incl. v7x).


def _value_loss_kernel(v_ref, ov_ref, r_ref, o_ref, acc_ref, *, clip_eps: float):
    k = pl.program_id(1)

    @pl.when(k == 0)
    def _zero():
        acc_ref[...] = jnp.zeros_like(acc_ref)

    v = v_ref[...].astype(jnp.float32)
    ov = ov_ref[...].astype(jnp.float32)
    r = r_ref[...].astype(jnp.float32)

    d = v - ov                         # values - old_values
    e = v - r                          # values - reward
    # (old_values + clip(d, -eps, eps)) - reward == e - d + clip(d, -eps, eps)
    surr1 = (e - d + jnp.clip(d, -clip_eps, clip_eps)) ** 2
    surr2 = e * e
    acc_ref[...] += jnp.maximum(surr1, surr2)

    @pl.when(k == pl.num_programs(1) - 1)
    def _finalize():
        acc = acc_ref[...]
        # Reduce rows down to one (8, 128) vreg worth of partial sums
        # (pure VPU adds across vregs), store lane-dense.
        o_ref[0] = jnp.sum(
            acc.reshape(acc.shape[0] // SUBLANES, SUBLANES, acc.shape[1]),
            axis=0,
        )


def value_loss(values: jax.Array,
               old_values: jax.Array,
               reward: jax.Array,
               clip_eps: float = 0.4,
               action_mask=None) -> jax.Array:
    """Pallas TPU implementation of ValueLoss.forward.

    action_mask is accepted for API parity but unused, matching the
    reference forward.
    """
    del action_mask  # unused in the reference forward
    assert values.shape == old_values.shape == reward.shape
    n = values.size
    assert n > 0
    itemsize = jnp.dtype(values.dtype).itemsize

    # Lane-dense layout: flatten, pad with zeros, view as (rows, 128).
    rows = pl.cdiv(n, LANES)
    block_rows = min(MAX_BLOCK_ROWS, SUBLANES * pl.cdiv(rows, SUBLANES))
    steps = pl.cdiv(rows, NUM_SLICES * block_rows)
    padded_rows = NUM_SLICES * block_rows * steps
    total = padded_rows * LANES

    def _prep(x):
        x = jnp.ravel(x)
        x = jnp.pad(x, (0, total - n))   # zero pad -> exactly 0 loss contribution
        return x.reshape(padded_rows, LANES)

    v2, ov2, r2 = _prep(values), _prep(old_values), _prep(reward)

    kernel = functools.partial(_value_loss_kernel, clip_eps=float(clip_eps))

    in_spec = pl.BlockSpec((block_rows, LANES),
                           lambda s, k: (s * steps + k, 0))
    out_spec = pl.BlockSpec((1, SUBLANES, LANES), lambda s, k: (s, 0, 0))

    cost = pl.CostEstimate(
        flops=10 * n,
        transcendentals=0,
        bytes_accessed=3 * n * itemsize + NUM_SLICES * SUBLANES * LANES * 4,
    )

    partials = pl.pallas_call(
        kernel,
        out_shape=jax.ShapeDtypeStruct((NUM_SLICES, SUBLANES, LANES), jnp.float32),
        grid=(NUM_SLICES, steps),
        in_specs=[in_spec, in_spec, in_spec],
        out_specs=out_spec,
        scratch_shapes=[pltpu.VMEM((block_rows, LANES), jnp.float32)],
        compiler_params=pltpu.CompilerParams(
            dimension_semantics=("parallel", "arbitrary")),
        cost_estimate=cost,
    )(v2, ov2, r2)

    return (0.5 / n) * jnp.sum(partials)


def value_loss_ref(values, old_values, reward, clip_eps: float = 0.4):
    """Pure-JAX reference matching the PyTorch module."""
    clipped = old_values + jnp.clip(values - old_values, -clip_eps, clip_eps)
    surr1 = (clipped - reward) ** 2
    surr2 = (values - reward) ** 2
    return 0.5 * jnp.mean(jnp.maximum(surr1, surr2))


if __name__ == "__main__":
    B, S = 2, 8
    key = jax.random.PRNGKey(0)
    k1, k2, k3 = jax.random.split(key, 3)
    values = jax.random.normal(k1, (B, S), dtype=jnp.float32)
    old_values = jax.random.normal(k2, (B, S), dtype=jnp.float32)
    reward = jax.random.normal(k3, (B, S), dtype=jnp.float32)

    out = value_loss(values, old_values, reward, clip_eps=0.4)
    out = jax.block_until_ready(out)

    ref = value_loss_ref(values, old_values, reward, clip_eps=0.4)
    assert jnp.allclose(out, ref, atol=1e-6, rtol=1e-5), (out, ref)

    print("KERNEL_OK")
</pallas_src>

<mosaic_0001>
module attributes {stable_mosaic.version = 11 : i64} {
  func.func @_value_loss_kernel(%arg0: i32, %arg1: i32, %arg2: memref<8x128xf32, #tpu.memory_space<vmem>>, %arg3: memref<8x128xf32, #tpu.memory_space<vmem>>, %arg4: memref<8x128xf32, #tpu.memory_space<vmem>>, %arg5: memref<1x8x128xf32, #tpu.memory_space<vmem>>, %arg6: memref<8x128xf32, #tpu.memory_space<vmem>>) attributes {dimension_semantics = [#tpu.dimension_semantics<parallel>, #tpu.dimension_semantics<arbitrary>], iteration_bounds = array<i64: 2, 1>, scalar_prefetch = 0 : i64, scratch_operands = 1 : i64, tpu.core_type = #tpu.core_type<tc>, window_params = [{transform_indices = @transform_0, window_bounds = array<i64: 8, 128>}, {transform_indices = @transform_1, window_bounds = array<i64: 8, 128>}, {transform_indices = @transform_2, window_bounds = array<i64: 8, 128>}, {transform_indices = @transform_3, window_bounds = array<i64: 1, 8, 128>}]} {
    %c0_i32 = arith.constant 0 : i32
    %0 = arith.cmpi eq, %arg1, %c0_i32 : i32
    %1 = arith.extui %0 : i1 to i32
    %c0_i32_0 = arith.constant 0 : i32
    %2 = arith.cmpi ne, %1, %c0_i32_0 : i32
    scf.if %2 {
      %cst_13 = arith.constant 0.000000e+00 : f32
      %23 = vector.broadcast %cst_13 : f32 to vector<8x128xf32>
      %c0_14 = arith.constant 0 : index
      %c0_15 = arith.constant 0 : index
      %24 = vector.load %arg6[%c0_14, %c0_15] : memref<8x128xf32, #tpu.memory_space<vmem>>, vector<8x128xf32>
      tpu.vector_store %arg6[%c0_14, %c0_15], %23 {strides = array<i32>} : memref<8x128xf32, #tpu.memory_space<vmem>>, vector<8x128xf32>,
    } else {
    }
    %c0 = arith.constant 0 : index
    %c0_1 = arith.constant 0 : index
    %3 = vector.load %arg2[%c0, %c0_1] : memref<8x128xf32, #tpu.memory_space<vmem>>, vector<8x128xf32>
    %c0_2 = arith.constant 0 : index
    %c0_3 = arith.constant 0 : index
    %4 = vector.load %arg3[%c0_2, %c0_3] : memref<8x128xf32, #tpu.memory_space<vmem>>, vector<8x128xf32>
    %c0_4 = arith.constant 0 : index
    %c0_5 = arith.constant 0 : index
    %5 = vector.load %arg4[%c0_4, %c0_5] : memref<8x128xf32, #tpu.memory_space<vmem>>, vector<8x128xf32>
    %6 = arith.subf %3, %4 : vector<8x128xf32>
    %7 = arith.subf %3, %5 : vector<8x128xf32>
    %8 = arith.subf %7, %6 : vector<8x128xf32>
    %cst = arith.constant -4.000000e-01 : f32
    %cst_6 = arith.constant 4.000000e-01 : f32
    %9 = vector.broadcast %cst : f32 to vector<8x128xf32>
    %10 = arith.maximumf %9, %6 : vector<8x128xf32>
    %11 = vector.broadcast %cst_6 : f32 to vector<8x128xf32>
    %12 = arith.minimumf %11, %10 : vector<8x128xf32>
    %13 = arith.addf %8, %12 : vector<8x128xf32>
    %14 = arith.mulf %13, %13 : vector<8x128xf32>
    %15 = arith.mulf %7, %7 : vector<8x128xf32>
    %c0_7 = arith.constant 0 : index
    %c0_8 = arith.constant 0 : index
    %16 = vector.load %arg6[%c0_7, %c0_8] : memref<8x128xf32, #tpu.memory_space<vmem>>, vector<8x128xf32>
    %17 = arith.maximumf %14, %15 : vector<8x128xf32>
    %18 = arith.addf %16, %17 : vector<8x128xf32>
    %c0_9 = arith.constant 0 : index
    %c0_10 = arith.constant 0 : index
    %19 = vector.load %arg6[%c0_9, %c0_10] : memref<8x128xf32, #tpu.memory_space<vmem>>, vector<8x128xf32>
    tpu.vector_store %arg6[%c0_9, %c0_10], %18 {strides = array<i32>} : memref<8x128xf32, #tpu.memory_space<vmem>>, vector<8x128xf32>,
    %c0_i32_11 = arith.constant 0 : i32
    %20 = arith.cmpi eq, %arg1, %c0_i32_11 : i32
    %21 = arith.extui %20 : i1 to i32
    %c0_i32_12 = arith.constant 0 : i32
    %22 = arith.cmpi ne, %21, %c0_i32_12 : i32
    scf.if %22 {
      %c0_13 = arith.constant 0 : index
      %c0_14 = arith.constant 0 : index
      %23 = vector.load %arg6[%c0_13, %c0_14] : memref<8x128xf32, #tpu.memory_space<vmem>>, vector<8x128xf32>
      %24 = vector.shape_cast %23 : vector<8x128xf32> to vector<1x8x128xf32>
      %cst_15 = arith.constant dense<0.000000e+00> : vector<8x128xf32>
      %25 = vector.multi_reduction <add>, %24, %cst_15 [0] : vector<1x8x128xf32> to vector<8x128xf32>
      %c0_16 = arith.constant 0 : index
      %c0_17 = arith.constant 0 : index
      %c0_18 = arith.constant 0 : index
      %26 = vector.load %arg5[%c0_16, %c0_17, %c0_18] : memref<1x8x128xf32, #tpu.memory_space<vmem>>, vector<1x8x128xf32>
      %27 = vector.shape_cast %26 : vector<1x8x128xf32> to vector<8x128xf32>
      %28 = vector.shape_cast %25 : vector<8x128xf32> to vector<1x8x128xf32>
      tpu.vector_store %arg5[%c0_16, %c0_17, %c0_18], %28 {strides = array<i32>} : memref<1x8x128xf32, #tpu.memory_space<vmem>>, vector<1x8x128xf32>,
    } else {
    }
    return
  }
  func.func @transform_0(%arg0: i32, %arg1: i32) -> (i32, i32) {
    %c1_i32 = arith.constant 1 : i32
    %0 = arith.muli %arg0, %c1_i32 : i32
    %1 = arith.addi %0, %arg1 : i32
    %c0_i32 = arith.constant 0 : i32
    %c0_i32_0 = arith.constant 0 : i32
    return %1, %c0_i32 : i32, i32
  }
  func.func @transform_1(%arg0: i32, %arg1: i32) -> (i32, i32) {
    %c1_i32 = arith.constant 1 : i32
    %0 = arith.muli %arg0, %c1_i32 : i32
    %1 = arith.addi %0, %arg1 : i32
    %c0_i32 = arith.constant 0 : i32
    %c0_i32_0 = arith.constant 0 : i32
    return %1, %c0_i32 : i32, i32
  }
  func.func @transform_2(%arg0: i32, %arg1: i32) -> (i32, i32) {
    %c1_i32 = arith.constant 1 : i32
    %0 = arith.muli %arg0, %c1_i32 : i32
    %1 = arith.addi %0, %arg1 : i32
    %c0_i32 = arith.constant 0 : i32
    %c0_i32_0 = arith.constant 0 : i32
    return %1, %c0_i32 : i32, i32
  }
  func.func @transform_3(%arg0: i32, %arg1: i32) -> (i32, i32, i32) {
    %c0_i32 = arith.constant 0 : i32
    %c0_i32_0 = arith.constant 0 : i32
    %c0_i32_1 = arith.constant 0 : i32
    return %arg0, %c0_i32, %c0_i32_0 : i32, i32, i32
  }
}

</mosaic_0001>

<llo_original>
// kernel: tpu_custom_call.1
$region0: #{tpu_custom_call.1}
  #allocation0 [shape = 'u32[]', space=smem, size = 0x4, offset = 0x4, fixed_abs, tag = 'smem constant byte address 0x4 - core index']
  #allocation1 [shape = 'u32[72,128]{1,0:T(1,128)}', space=vmem, size = 0x9000, scoped, tag = 'internal scratch']
  #allocation2 [shape = 'f32[8,128]{1,0:T(8,128)}', space=vmem, size = 0x1000, scoped, tag = 'scratch operand']
  %s0 = inlined_call_operand.hbm [shape: f32[16,128], index: 0, kind: input, shape index: {}]
  %s1 = inlined_call_operand.hbm [shape: f32[16,128], index: 1, kind: input, shape index: {}]
  %s2 = inlined_call_operand.hbm [shape: f32[16,128], index: 2, kind: input, shape index: {}]
  %s3 = inlined_call_operand.hbm [shape: f32[2,8,128], index: 3, kind: output, shape index: {}]
  %s4 = sld [smem:[#allocation0]]
  $region65: #{tpu_custom_call.1} parent=0
    _
  %s6 = ssub.s32 1, %s4
  %s7 = scalar_select 0, %s6, %s4
  $region1: #{tpu_custom_call.1} parent=0
    #allocation3 [shape = 'u8[8192]{0}', space=vmem, size = 0x2000, scoped, tag = 'input window, operand 0']
    #allocation4 [shape = 's32[2]{0}', space=sflag, size = 0x8, scoped, tag = 'scoped memory for tpu_custom_call.1']
    #allocation5 [shape = 's32[2]{0}', space=sflag, size = 0x8, scoped, tag = 'scoped memory for tpu_custom_call.1']
    #allocation6 [shape = 'u8[8192]{0}', space=vmem, size = 0x2000, scoped, tag = 'input window, operand 1']
    #allocation7 [shape = 's32[2]{0}', space=sflag, size = 0x8, scoped, tag = 'scoped memory for tpu_custom_call.1']
    #allocation8 [shape = 'u8[8192]{0}', space=vmem, size = 0x2000, scoped, tag = 'input window, operand 2']
    #allocation9 [shape = 'u8[8192]{0}', space=vmem, size = 0x2000, scoped, tag = 'output window, operand 0']
    %8 = vsyncpa [#allocation4], 0
    %s9 = scalar_lea.sflag [#allocation4], 1
    %10 = vsyncpa %s9, 0
    %11 = vsyncpa [#allocation7], 0
    %s12 = scalar_lea.sflag [#allocation7], 1
    %13 = vsyncpa %s12, 0
    %14 = vsyncpa [#allocation5], 0
    %s15 = scalar_lea.sflag [#allocation5], 1
    %16 = vsyncpa %s15, 0
    loop: start=0, step=1, limit=4
    $region2: #{tpu_custom_call.1} parent=1 // loop_pre_header
      _
    $region3: #{tpu_custom_call.1} parent=1 // loop_header
      %s18 = sphi 0, %s22
      %p19 = scmp.ge.s32.totalorder %s18, 4
      %s25 = sphi 0, %s37
      %s26 = sphi 0, %s33
      %s27 = sphi 0, %s25
      %s28 = sphi 0, %s26
      %s29 = sphi 0, %s27
      %s30 = sphi 0, %s28
      %s42 = sphi 0, %s44
      %s45 = sphi 0, %s42
      %s46 = sphi 0, %s45
      %s62 = sphi 0, %s46
      %s70 = sphi 0, %s72
      %s73 = sphi 0, %s70
      %s74 = sphi 0, %s73
      %s90 = sphi 0, %s74
      %s98 = sphi 0, %s100
      %s101 = sphi 0, %s98
      %s102 = sphi 0, %s101
      %s118 = sphi 0, %s102
      %s124 = sphi 0, %s126
      %s127 = sphi 0, %s124
      %s128 = sphi 0, %s127
      %s144 = sphi 0, %s128
    $region4: #{tpu_custom_call.1} parent=1 // loop_header_branch
      %21 = sbr.rel (%p19) target = $region8
    $region5: #{tpu_custom_call.1} parent=1 // loop_body
      %s23 = ssub.s32 %s18, 1
      %s24 = ssub.s32 %s18, 2
      %s31 = sadd.s32 1, %s26
      %p32 = scmp.ge.s32.totalorder %s31, 1
      %s33 = scalar_select %p32, 0, %s31
      %s34 = sadd.s32 1, %s25
      %s35 = scalar_select %p32, %s34, %s25
      %p36 = scmp.ge.s32.totalorder %s35, 2
      %s37 = scalar_select %p36, 0, %s35
      %s38 = sadd.s32 %s25, %s26
      %s39 = sadd.s32 %s37, %s33
      %s40 = ssub.s32 %s38, %s39
      %p41 = scmp.eq.s32.totalorder %s40, 0
      %s43 = sadd.s32 %s42, 1
      %s44 = scalar_select %p41, %s42, %s43
      %p47 = pneg %p41
      %p48 = scmp.eq.s32.totalorder %s18, 1
      %p49 = por %p47, %p48
      %p50 = scmp.ne.s32.totalorder %s42, %s45
      %p51 = scmp.eq.s32.totalorder %s18, 0
      %p52 = por %p50, %p51
      %p53 = scmp.ne.s32.totalorder %s42, %s45
      %p54 = scmp.eq.s32.totalorder %s23, 1
      %p55 = por %p53, %p54
      %p56 = scmp.ne.s32.totalorder %s45, %s46
      %p57 = scmp.eq.s32.totalorder %s23, 0
      %p58 = por %p56, %p57
      %p59 = scmp.ne.s32.totalorder %s45, %s46
      %p60 = scmp.eq.s32.totalorder %s24, 1
      %p61 = por %p59, %p60
      %p63 = scmp.ne.s32.totalorder %s46, %s62
      %p64 = scmp.eq.s32.totalorder %s24, 0
      %p65 = por %p63, %p64
      %s66 = sadd.s32 %s25, %s26
      %s67 = sadd.s32 %s37, %s33
      %s68 = ssub.s32 %s66, %s67
      %p69 = scmp.eq.s32.totalorder %s68, 0
      %s71 = sadd.s32 %s70, 1
      %s72 = scalar_select %p69, %s70, %s71
      %p75 = pneg %p69
      %p76 = scmp.eq.s32.totalorder %s18, 1
      %p77 = por %p75, %p76
      %p78 = scmp.ne.s32.totalorder %s70, %s73
      %p79 = scmp.eq.s32.totalorder %s18, 0
      %p80 = por %p78, %p79
      %p81 = scmp.ne.s32.totalorder %s70, %s73
      %p82 = scmp.eq.s32.totalorder %s23, 1
      %p83 = por %p81, %p82
      %p84 = scmp.ne.s32.totalorder %s73, %s74
      %p85 = scmp.eq.s32.totalorder %s23, 0
      %p86 = por %p84, %p85
      %p87 = scmp.ne.s32.totalorder %s73, %s74
      %p88 = scmp.eq.s32.totalorder %s24, 1
      %p89 = por %p87, %p88
      %p91 = scmp.ne.s32.totalorder %s74, %s90
      %p92 = scmp.eq.s32.totalorder %s24, 0
      %p93 = por %p91, %p92
      %s94 = sadd.s32 %s25, %s26
      %s95 = sadd.s32 %s37, %s33
      %s96 = ssub.s32 %s94, %s95
      %p97 = scmp.eq.s32.totalorder %s96, 0
      %s99 = sadd.s32 %s98, 1
      %s100 = scalar_select %p97, %s98, %s99
      %p103 = pneg %p97
      %p104 = scmp.eq.s32.totalorder %s18, 1
      %p105 = por %p103, %p104
      %p106 = scmp.ne.s32.totalorder %s98, %s101
      %p107 = scmp.eq.s32.totalorder %s18, 0
      %p108 = por %p106, %p107
      %p109 = scmp.ne.s32.totalorder %s98, %s101
      %p110 = scmp.eq.s32.totalorder %s23, 1
      %p111 = por %p109, %p110
      %p112 = scmp.ne.s32.totalorder %s101, %s102
      %p113 = scmp.eq.s32.totalorder %s23, 0
      %p114 = por %p112, %p113
      %p115 = scmp.ne.s32.totalorder %s101, %s102
      %p116 = scmp.eq.s32.totalorder %s24, 1
      %p117 = por %p115, %p116
      %p119 = scmp.ne.s32.totalorder %s102, %s118
      %p120 = scmp.eq.s32.totalorder %s24, 0
      %p121 = por %p119, %p120
      %s122 = ssub.s32 %s25, %s37
      %p123 = scmp.eq.s32.totalorder %s122, 0
      %s125 = sadd.s32 %s124, 1
      %s126 = scalar_select %p123, %s124, %s125
      %p129 = pneg %p123
      %p130 = scmp.eq.s32.totalorder %s18, 1
      %p131 = por %p129, %p130
      %p132 = scmp.ne.s32.totalorder %s124, %s127
      %p133 = scmp.eq.s32.totalorder %s18, 0
      %p134 = por %p132, %p133
      %p135 = scmp.ne.s32.totalorder %s124, %s127
      %p136 = scmp.eq.s32.totalorder %s23, 1
      %p137 = por %p135, %p136
      %p138 = scmp.ne.s32.totalorder %s127, %s128
      %p139 = scmp.eq.s32.totalorder %s23, 0
      %p140 = por %p138, %p139
      %p141 = scmp.ne.s32.totalorder %s127, %s128
      %p142 = scmp.eq.s32.totalorder %s24, 1
      %p143 = por %p141, %p142
      %p145 = scmp.ne.s32.totalorder %s128, %s144
      %p146 = scmp.eq.s32.totalorder %s24, 0
      %p147 = por %p145, %p146
      %p148 = scmp.le.s32.totalorder 1, %s18
      %p149 = scmp.lt.s32.totalorder %s18, 3
      %p150 = pnand %p148, %p149
      %p151 = pneg %p150
      // Predicated region
      $region9: #{tpu_custom_call.1} parent=5 // pred_check
        _
      $region10: #{tpu_custom_call.1} parent=5 // pred_check_branch
        %153 = sbr.rel (%p150) target = $region12
      $region11: #{tpu_custom_call.1} parent=5 // pred_region
        %s154 = ssub.s32 %s18, 1
      $region12: #{tpu_custom_call.1} parent=5 // pred_fallthru
        _
      %p155 = scmp.lt.s32.totalorder %s18, 2
      // Predicated region
      $region13: #{tpu_custom_call.1} parent=5 // pred_check
        %p156 = pneg %p155
      $region14: #{tpu_custom_call.1} parent=5 // pred_check_branch
        %158 = sbr.rel (%p156) target = $region16
      $region15: #{tpu_custom_call.1} parent=5 // pred_region
        // Predicated region
        $region17: #{tpu_custom_call.1} parent=15 // pred_check
          %p159 = pneg %p52
        $region18: #{tpu_custom_call.1} parent=15 // pred_check_branch
          %161 = sbr.rel (%p159) target = $region20
        $region19: #{tpu_custom_call.1} parent=15 // pred_region
          %s162 = sand.u32 %s42, 1
          %s163 = scalar_lea.sflag [#allocation4], %s162
          %s164 = sand.u32 %s42, 1
          %s165 = smul.addr %s164, 8
          %s166 = scalar_lea.vmem [#allocation3], %s165
          %s167 = sadd.s32 %s25, %s26
          %169 = vsyncadd %s163, 0
          %s170 = smul.addr %s167, 8
          %s171 = scalar_lea.hbm %s0, %s170
          %s173 = sshll.u32 %s171, 4
          %s174 = int_to_ptr.hbm [resolvable:$true] %s173
          %s175 = sshll.u32 %s166, 4
          %s176 = int_to_ptr.vmem [resolvable:$true] %s175
          %178 = dma.hbm_to_vmem [thread:$0]  %s174, 128, %s176, %s163
        $region20: #{tpu_custom_call.1} parent=15 // pred_fallthru
          _
        // Predicated region
        $region21: #{tpu_custom_call.1} parent=15 // pred_check
          %p179 = pneg %p80
        $region22: #{tpu_custom_call.1} parent=15 // pred_check_branch
          %181 = sbr.rel (%p179) target = $region24
        $region23: #{tpu_custom_call.1} parent=15 // pred_region
          %s182 = sand.u32 %s18, 1
          %s183 = scalar_lea.sflag [#allocation7], %s182
          %s184 = sand.u32 %s70, 1
          %s185 = smul.addr %s184, 8
          %s186 = scalar_lea.vmem [#allocation6], %s185
          %s187 = sadd.s32 %s25, %s26
          %189 = vsyncadd %s183, 0
          %s190 = smul.addr %s187, 8
          %s191 = scalar_lea.hbm %s1, %s190
          %s193 = sshll.u32 %s191, 4
          %s194 = int_to_ptr.hbm [resolvable:$true] %s193
          %s195 = sshll.u32 %s186, 4
          %s196 = int_to_ptr.vmem [resolvable:$true] %s195
          %198 = dma.hbm_to_vmem [thread:$0]  %s194, 128, %s196, %s183
        $region24: #{tpu_custom_call.1} parent=15 // pred_fallthru
          _
        // Predicated region
        $region25: #{tpu_custom_call.1} parent=15 // pred_check
          %p199 = pneg %p108
        $region26: #{tpu_custom_call.1} parent=15 // pred_check_branch
          %201 = sbr.rel (%p199) target = $region28
        $region27: #{tpu_custom_call.1} parent=15 // pred_region
          %s202 = sand.u32 %s18, 1
          %s203 = scalar_lea.sflag [#allocation7], %s202
          %s204 = sand.u32 %s98, 1
          %s205 = smul.addr %s204, 8
          %s206 = scalar_lea.vmem [#allocation8], %s205
          %s207 = sadd.s32 %s25, %s26
          %209 = vsyncadd %s203, 0
          %s210 = smul.addr %s207, 8
          %s211 = scalar_lea.hbm %s2, %s210
          %s213 = sshll.u32 %s211, 4
          %s214 = int_to_ptr.hbm [resolvable:$true] %s213
          %s215 = sshll.u32 %s206, 4
          %s216 = int_to_ptr.vmem [resolvable:$true] %s215
          %218 = dma.hbm_to_vmem [thread:$0]  %s214, 128, %s216, %s203
        $region28: #{tpu_custom_call.1} parent=15 // pred_fallthru
          _
      $region16: #{tpu_custom_call.1} parent=5 // pred_fallthru
        _
      %p219 = scmp.le.s32.totalorder 1, %s18
      %p220 = scmp.lt.s32.totalorder %s18, 3
      %p221 = pnand %p219, %p220
      %p222 = pneg %p221
      // Predicated region
      $region29: #{tpu_custom_call.1} parent=5 // pred_check
        _
      $region30: #{tpu_custom_call.1} parent=5 // pred_check_branch
        %224 = sbr.rel (%p221) target = $region32
      $region31: #{tpu_custom_call.1} parent=5 // pred_region
        %s225 = ssub.s32 %s18, 1
        %s226 = sand.u32 %s45, 1
        %s227 = scalar_lea.sflag [#allocation4], %s226
        %s228 = sand.u32 %s45, 1
        %s229 = smul.addr %s228, 8
        %s230 = scalar_lea.vmem [#allocation3], %s229
        // Predicated region
        $region33: #{tpu_custom_call.1} parent=31 // pred_check
          %p231 = pneg %p58
        $region34: #{tpu_custom_call.1} parent=31 // pred_check_branch
          %233 = sbr.rel (%p231) target = $region36
        $region35: #{tpu_custom_call.1} parent=31 // pred_region
          %235 = dma.done %s227, 128
        $region36: #{tpu_custom_call.1} parent=31 // pred_fallthru
          _
        %s236 = sand.u32 %s23, 1
        %s237 = scalar_lea.sflag [#allocation7], %s236
        %s238 = sand.u32 %s73, 1
        %s239 = smul.addr %s238, 8
        %s240 = scalar_lea.vmem [#allocation6], %s239
        // Predicated region
        $region37: #{tpu_custom_call.1} parent=31 // pred_check
          %p241 = pneg %p86
        $region38: #{tpu_custom_call.1} parent=31 // pred_check_branch
          %243 = sbr.rel (%p241) target = $region40
        $region39: #{tpu_custom_call.1} parent=31 // pred_region
          %245 = dma.done %s237, 128
        $region40: #{tpu_custom_call.1} parent=31 // pred_fallthru
          _
        %s246 = sand.u32 %s23, 1
        %s247 = scalar_lea.sflag [#allocation7], %s246
        %s248 = sand.u32 %s101, 1
        %s249 = smul.addr %s248, 8
        %s250 = scalar_lea.vmem [#allocation8], %s249
        // Predicated region
        $region41: #{tpu_custom_call.1} parent=31 // pred_check
          %p251 = pneg %p114
        $region42: #{tpu_custom_call.1} parent=31 // pred_check_branch
          %253 = sbr.rel (%p251) target = $region44
        $region43: #{tpu_custom_call.1} parent=31 // pred_region
          %255 = dma.done %s247, 128
        $region44: #{tpu_custom_call.1} parent=31 // pred_fallthru
          _
        %s256 = sand.u32 %s45, 1
        %s257 = scalar_lea.sflag [#allocation4], %s256
        %s258 = sand.u32 %s45, 1
        %s259 = smul.addr %s258, 8
        %s260 = scalar_lea.vmem [#allocation3], %s259
        %p261 = pneg %p58
        %p262 = pneg %p55
        %s263 = sand.u32 %s23, 1
        %s264 = scalar_lea.sflag [#allocation7], %s263
        %s265 = sand.u32 %s73, 1
        %s266 = smul.addr %s265, 8
        %s267 = scalar_lea.vmem [#allocation6], %s266
        %p268 = pneg %p86
        %p269 = pneg %p83
        %s270 = sand.u32 %s23, 1
        %s271 = scalar_lea.sflag [#allocation7], %s270
        %s272 = sand.u32 %s101, 1
        %s273 = smul.addr %s272, 8
        %s274 = scalar_lea.vmem [#allocation8], %s273
        %p275 = pneg %p114
        %p276 = pneg %p111
        %p277 = pneg %p140
        %p278 = pneg %p137
        %s279 = sand.u32 %s127, 1
        %s280 = scalar_lea.sflag [#allocation5], %s279
        %s281 = sand.u32 %s127, 1
        %s282 = smul.addr %s281, 8
        %s283 = scalar_lea.vmem [#allocation9], %s282
        %s284 = sadd.s32 %s27, %s28
        %s285 = sadd.s32 %s27, %s28
        %s286 = sadd.s32 %s27, %s28
        %p287 = scmp.eq.s32.totalorder %s28, 0
        // Predicated region
        $region45: #{tpu_custom_call.1} parent=31 // pred_check
          %p288 = pneg %p287
        $region46: #{tpu_custom_call.1} parent=31 // pred_check_branch
          %290 = sbr.rel (%p288) target = $region48
        $region47: #{tpu_custom_call.1} parent=31 // pred_region
          %291 = vst [vmem:[#allocation2] sm:$0xff] 0.0
        $region48: #{tpu_custom_call.1} parent=31 // pred_fallthru
          _
        %v292 = vld [vmem:[%s230] sm:$0xff]
        %v293 = vld [vmem:[%s240] sm:$0xff]
        %v294 = vld [vmem:[%s250] sm:$0xff]
        %v295 = vsub.f32 %v292, %v293
        %v296 = vsub.f32 %v292, %v294
        %v297 = vsub.f32 %v296, %v295
        %v298 = vmax.f32 %v295, -0.4
        %v299 = vmin.f32 %v298, 0.4
        %v300 = vadd.f32 %v297, %v299
        %v301 = vmul.f32 %v300, %v300
        %v302 = vmul.f32 %v296, %v296
        %v303 = vld [vmem:[#allocation2] sm:$0xff]
        %v304 = vmax.f32 %v301, %v302
        %v305 = vadd.f32 %v303, %v304
        %306 = vst [vmem:[#allocation2] sm:$0xff] %v305
        // Predicated region
        $region49: #{tpu_custom_call.1} parent=31 // pred_check
          %p307 = pneg %p287
        $region50: #{tpu_custom_call.1} parent=31 // pred_check_branch
          %309 = sbr.rel (%p307) target = $region52
        $region51: #{tpu_custom_call.1} parent=31 // pred_region
          %v310 = vld [vmem:[#allocation2] sm:$0xff]
          %v311 = vadd.f32 %v310, 0.0
          %312 = vst [vmem:[%s283] sm:$0xff] %v311
        $region52: #{tpu_custom_call.1} parent=31 // pred_fallthru
          _
        %s313 = sand.u32 %s127, 1
        %s314 = scalar_lea.sflag [#allocation5], %s313
        %s315 = sand.u32 %s127, 1
        %s316 = smul.addr %s315, 8
        %s317 = scalar_lea.vmem [#allocation9], %s316
        // Predicated region
        $region53: #{tpu_custom_call.1} parent=31 // pred_check
          %p318 = pneg %p137
        $region54: #{tpu_custom_call.1} parent=31 // pred_check_branch
          %320 = sbr.rel (%p318) target = $region56
        $region55: #{tpu_custom_call.1} parent=31 // pred_region
          %322 = vsyncadd %s314, 0
          %s323 = smul.addr %s27, 8
          %s324 = scalar_lea.hbm %s3, %s323
          %s326 = sshll.u32 %s317, 4
          %s327 = int_to_ptr.vmem [resolvable:$true] %s326
          %s328 = sshll.u32 %s324, 4
          %s329 = int_to_ptr.hbm [resolvable:$true] %s328
          %331 = dma.vmem_to_hbm [thread:$0]  %s327, 128, %s329, %s314
        $region56: #{tpu_custom_call.1} parent=31 // pred_fallthru
          _
      $region32: #{tpu_custom_call.1} parent=5 // pred_fallthru
        _
      %p332 = scmp.le.s32.totalorder 2, %s18
      // Predicated region
      $region57: #{tpu_custom_call.1} parent=5 // pred_check
        %p333 = pneg %p332
      $region58: #{tpu_custom_call.1} parent=5 // pred_check_branch
        %335 = sbr.rel (%p333) target = $region60
      $region59: #{tpu_custom_call.1} parent=5 // pred_region
        %s336 = ssub.s32 %s18, 2
        // Predicated region
        $region61: #{tpu_custom_call.1} parent=59 // pred_check
          %p337 = pneg %p143
        $region62: #{tpu_custom_call.1} parent=59 // pred_check_branch
          %339 = sbr.rel (%p337) target = $region64
        $region63: #{tpu_custom_call.1} parent=59 // pred_region
          %s340 = sand.u32 %s128, 1
          %s341 = scalar_lea.sflag [#allocation5], %s340
          %s342 = sand.u32 %s128, 1
          %s343 = smul.addr %s342, 8
          %s344 = scalar_lea.vmem [#allocation9], %s343
          %346 = dma.done %s341, 128
        $region64: #{tpu_custom_call.1} parent=59 // pred_fallthru
          _
      $region60: #{tpu_custom_call.1} parent=5 // pred_fallthru
        _
    $region6: #{tpu_custom_call.1} parent=1 // loop_footer
      %s22 = sadd.s32 1, %s18
    $region7: #{tpu_custom_call.1} parent=1 // loop_footer_branch
      %17 = sbr.rel target = $region3
    $region8: #{tpu_custom_call.1} parent=1 // loop_exit
      _
    %347 = vsyncpa [#allocation4], 1
    %s348 = scalar_lea.sflag [#allocation4], 1
    %349 = vsyncpa %s348, 1
    %350 = vsyncpa [#allocation7], 1
    %s351 = scalar_lea.sflag [#allocation7], 1
    %352 = vsyncpa %s351, 1
    %353 = vsyncpa [#allocation5], 1
    %s354 = scalar_lea.sflag [#allocation5], 1
    %355 = vsyncpa %s354, 1

</llo_original>
